<compile_context>
chip_gen: v7x
topology: tpu7x:2x2x1
jax: 0.10.0
libtpu: 0.0.40
codegen_flags: <defaults>
</compile_context>

<pallas_src>
import functools

import jax
import jax.numpy as jnp
from jax.experimental import pallas as pl
from jax.experimental.pallas import tpu as pltpu


LANE = 128          # TPU lane width — pad all feature dims to a multiple of this
SUBLANE_BF16 = 16   # bf16 sublane packing — batch tiles are multiples of this


def _round_up(x, m):
    return ((x + m - 1) // m) * m


def _policy_kernel(x_ref,
                   w1_ref, b1_ref,
                   w2_ref, b2_ref,
                   w3_ref, b3_ref,
                   w4_ref, b4_ref,
                   o_ref):
    """One batch tile: 3x (bf16 matmul + f32 bias + ReLU), bf16 matmul + bias + tanh."""
    h = x_ref[...]  # bf16 (tb, 128)

    h = jnp.dot(h, w1_ref[...], preferred_element_type=jnp.float32) + b1_ref[...]
    h = jnp.maximum(h, 0.0).astype(jnp.bfloat16)

    h = jnp.dot(h, w2_ref[...], preferred_element_type=jnp.float32) + b2_ref[...]
    h = jnp.maximum(h, 0.0).astype(jnp.bfloat16)

    h = jnp.dot(h, w3_ref[...], preferred_element_type=jnp.float32) + b3_ref[...]
    h = jnp.maximum(h, 0.0).astype(jnp.bfloat16)

    y = jnp.dot(h, w4_ref[...], preferred_element_type=jnp.float32) + b4_ref[...]
    o_ref[...] = jnp.tanh(y).astype(o_ref.dtype)


def policy_forward(x, params, *, block_batch=256):
    """x: (batch, input_dim) f32.  params: dict from init_policy_params."""
    layers = params["layers"]
    in_dim = params["in_dim"]
    out_dim = params["out_dim"]
    in_pad = layers[0][0].shape[0]
    out_pad = layers[-1][0].shape[1]

    batch = x.shape[0]
    # batch tile: multiple of 16 (bf16 sublane packing), capped at block_batch.
    tb = min(_round_up(block_batch, SUBLANE_BF16), _round_up(batch, SUBLANE_BF16))
    batch_p = _round_up(batch, tb)
    grid = (batch_p // tb,)

    # pad + cast activations once in the wrapper (halves input DMA bytes).
    xp = jnp.pad(x.astype(jnp.bfloat16),
                 ((0, batch_p - batch), (0, in_pad - in_dim)))

    flat_args = [xp]
    in_specs = [pl.BlockSpec((tb, in_pad), lambda i: (i, 0))]
    for w, b in layers:
        flat_args.extend([w, b])
        # weights/biases: full-array blocks, constant index -> VMEM-resident.
        in_specs.append(pl.BlockSpec(w.shape, lambda i: (0, 0)))
        in_specs.append(pl.BlockSpec(b.shape, lambda i: (0, 0)))

    flops = 2 * batch_p * sum(w.shape[0] * w.shape[1] for w, _ in layers)
    bytes_accessed = (xp.size * xp.dtype.itemsize
                      + sum(w.size * w.dtype.itemsize + b.size * b.dtype.itemsize
                            for w, b in layers)
                      + batch_p * out_pad * 4)
    cost = pl.CostEstimate(flops=flops,
                           transcendentals=batch_p * out_pad,
                           bytes_accessed=bytes_accessed)

    out = pl.pallas_call(
        _policy_kernel,
        out_shape=jax.ShapeDtypeStruct((batch_p, out_pad), jnp.float32),
        grid=grid,
        in_specs=in_specs,
        out_specs=pl.BlockSpec((tb, out_pad), lambda i: (i, 0)),
        compiler_params=pltpu.CompilerParams(
            dimension_semantics=("parallel",),
            vmem_limit_bytes=32 * 1024 * 1024),
        cost_estimate=cost,
    )(*flat_args)

    return out[:batch, :out_dim]


def init_policy_params(key, input_dim, output_dim, hidden_units=(256, 128, 64)):
    """Mirrors nn.Linear defaults; last-layer weight U(-0.003, 0.003).

    Weights are stored transposed (in, out), zero-padded to 128-lane multiples,
    and cast to bf16.  Biases are f32 (1, out_pad) rows (zero in padded cols).
    """
    layers = []
    fan_in = input_dim
    dims = list(hidden_units) + [output_dim]
    for i, fan_out in enumerate(dims):
        key, kw, kb = jax.random.split(key, 3)
        bound = 1.0 / float(fan_in) ** 0.5
        if i == len(dims) - 1:
            w = jax.random.uniform(kw, (fan_out, fan_in), jnp.float32, -0.003, 0.003)
        else:
            w = jax.random.uniform(kw, (fan_out, fan_in), jnp.float32, -bound, bound)
        b = jax.random.uniform(kb, (fan_out,), jnp.float32, -bound, bound)

        in_pad = _round_up(fan_in, LANE)
        out_pad = _round_up(fan_out, LANE)
        w_pad = jnp.zeros((in_pad, out_pad), jnp.float32).at[:fan_in, :fan_out].set(w.T)
        b_pad = jnp.zeros((1, out_pad), jnp.float32).at[:, :fan_out].set(b)
        layers.append((w_pad.astype(jnp.bfloat16), b_pad))
        fan_in = fan_out
    return {"layers": layers, "in_dim": input_dim, "out_dim": output_dim}


def policy_ref(x, params):
    """Pure-JAX reference that emulates the kernel's bf16-operand / f32-accum math."""
    layers = params["layers"]
    in_dim = params["in_dim"]
    out_dim = params["out_dim"]
    in_pad = layers[0][0].shape[0]

    h = jnp.zeros((x.shape[0], in_pad), jnp.float32).at[:, :in_dim].set(x)
    h = h.astype(jnp.bfloat16).astype(jnp.float32)
    for i, (w, b) in enumerate(layers):
        h = h @ w.astype(jnp.float32) + b
        if i < len(layers) - 1:
            h = jnp.maximum(h, 0.0).astype(jnp.bfloat16).astype(jnp.float32)
    return jnp.tanh(h)[:, :out_dim]


if __name__ == "__main__":
    key = jax.random.PRNGKey(0)
    batch, input_dim, output_dim = 8, 32, 8

    key, kx = jax.random.split(key)
    x = jax.random.normal(kx, (batch, input_dim), jnp.float32)

    params = init_policy_params(key, input_dim, output_dim)

    out = policy_forward(x, params)
    out = jax.block_until_ready(out)

    ref = policy_ref(x, params)
    assert out.shape == (batch, output_dim)
    assert jnp.allclose(out, ref, atol=1e-3, rtol=1e-3), "mismatch vs JAX reference"

    print("KERNEL_OK")
</pallas_src>

<mosaic_0001>
module attributes {stable_mosaic.version = 11 : i64} {
  func.func @_policy_kernel(%arg0: i32, %arg1: memref<16x128xbf16, #tpu.memory_space<vmem>>, %arg2: memref<128x256xbf16, #tpu.memory_space<vmem>>, %arg3: memref<1x256xf32, #tpu.memory_space<vmem>>, %arg4: memref<256x128xbf16, #tpu.memory_space<vmem>>, %arg5: memref<1x128xf32, #tpu.memory_space<vmem>>, %arg6: memref<128x128xbf16, #tpu.memory_space<vmem>>, %arg7: memref<1x128xf32, #tpu.memory_space<vmem>>, %arg8: memref<128x128xbf16, #tpu.memory_space<vmem>>, %arg9: memref<1x128xf32, #tpu.memory_space<vmem>>, %arg10: memref<16x128xf32, #tpu.memory_space<vmem>>) attributes {dimension_semantics = [#tpu.dimension_semantics<parallel>], iteration_bounds = array<i64: 1>, scalar_prefetch = 0 : i64, scratch_operands = 0 : i64, tpu.core_type = #tpu.core_type<tc>, window_params = [{transform_indices = @transform_0, window_bounds = array<i64: 16, 128>}, {pipeline_mode = #tpu.pipeline_mode<synchronous>, transform_indices = @transform_1, window_bounds = array<i64: 128, 256>}, {pipeline_mode = #tpu.pipeline_mode<synchronous>, transform_indices = @transform_2, window_bounds = array<i64: 1, 256>}, {pipeline_mode = #tpu.pipeline_mode<synchronous>, transform_indices = @transform_3, window_bounds = array<i64: 256, 128>}, {pipeline_mode = #tpu.pipeline_mode<synchronous>, transform_indices = @transform_4, window_bounds = array<i64: 1, 128>}, {pipeline_mode = #tpu.pipeline_mode<synchronous>, transform_indices = @transform_5, window_bounds = array<i64: 128, 128>}, {pipeline_mode = #tpu.pipeline_mode<synchronous>, transform_indices = @transform_6, window_bounds = array<i64: 1, 128>}, {pipeline_mode = #tpu.pipeline_mode<synchronous>, transform_indices = @transform_7, window_bounds = array<i64: 128, 128>}, {pipeline_mode = #tpu.pipeline_mode<synchronous>, transform_indices = @transform_8, window_bounds = array<i64: 1, 128>}, {transform_indices = @transform_9, window_bounds = array<i64: 16, 128>}]} {
    %c0 = arith.constant 0 : index
    %c0_0 = arith.constant 0 : index
    %0 = vector.load %arg1[%c0, %c0_0] : memref<16x128xbf16, #tpu.memory_space<vmem>>, vector<16x128xbf16>
    %c0_1 = arith.constant 0 : index
    %c0_2 = arith.constant 0 : index
    %1 = vector.load %arg2[%c0_1, %c0_2] : memref<128x256xbf16, #tpu.memory_space<vmem>>, vector<128x256xbf16>
    %cst = arith.constant dense<0.000000e+00> : vector<16x256xf32>
    %2 = tpu.matmul %0, %1, %cst {dimension_numbers = #tpu.dot_dimension_numbers<[1], [0], [0], [1], [0, 0, 1, 1], [], []>} : vector<16x128xbf16>, vector<128x256xbf16>, vector<16x256xf32> -> vector<16x256xf32>
    %c0_3 = arith.constant 0 : index
    %c0_4 = arith.constant 0 : index
    %3 = vector.load %arg3[%c0_3, %c0_4] : memref<1x256xf32, #tpu.memory_space<vmem>>, vector<1x256xf32>
    %4 = vector.broadcast %3 : vector<1x256xf32> to vector<16x256xf32>
    %5 = arith.addf %2, %4 : vector<16x256xf32>
    %cst_5 = arith.constant 0.000000e+00 : f32
    %6 = vector.broadcast %cst_5 : f32 to vector<16x256xf32>
    %7 = arith.maximumf %5, %6 : vector<16x256xf32>
    %8 = arith.truncf %7 : vector<16x256xf32> to vector<16x256xbf16>
    %c0_6 = arith.constant 0 : index
    %c0_7 = arith.constant 0 : index
    %9 = vector.load %arg4[%c0_6, %c0_7] : memref<256x128xbf16, #tpu.memory_space<vmem>>, vector<256x128xbf16>
    %cst_8 = arith.constant dense<0.000000e+00> : vector<16x128xf32>
    %10 = tpu.matmul %8, %9, %cst_8 {dimension_numbers = #tpu.dot_dimension_numbers<[1], [0], [0], [1], [0, 0, 1, 1], [], []>} : vector<16x256xbf16>, vector<256x128xbf16>, vector<16x128xf32> -> vector<16x128xf32>
    %c0_9 = arith.constant 0 : index
    %c0_10 = arith.constant 0 : index
    %11 = vector.load %arg5[%c0_9, %c0_10] : memref<1x128xf32, #tpu.memory_space<vmem>>, vector<1x128xf32>
    %12 = vector.broadcast %11 : vector<1x128xf32> to vector<16x128xf32>
    %13 = arith.addf %10, %12 : vector<16x128xf32>
    %cst_11 = arith.constant 0.000000e+00 : f32
    %14 = vector.broadcast %cst_11 : f32 to vector<16x128xf32>
    %15 = arith.maximumf %13, %14 : vector<16x128xf32>
    %16 = arith.truncf %15 : vector<16x128xf32> to vector<16x128xbf16>
    %c0_12 = arith.constant 0 : index
    %c0_13 = arith.constant 0 : index
    %17 = vector.load %arg6[%c0_12, %c0_13] : memref<128x128xbf16, #tpu.memory_space<vmem>>, vector<128x128xbf16>
    %cst_14 = arith.constant dense<0.000000e+00> : vector<16x128xf32>
    %18 = tpu.matmul %16, %17, %cst_14 {dimension_numbers = #tpu.dot_dimension_numbers<[1], [0], [0], [1], [0, 0, 1, 1], [], []>} : vector<16x128xbf16>, vector<128x128xbf16>, vector<16x128xf32> -> vector<16x128xf32>
    %c0_15 = arith.constant 0 : index
    %c0_16 = arith.constant 0 : index
    %19 = vector.load %arg7[%c0_15, %c0_16] : memref<1x128xf32, #tpu.memory_space<vmem>>, vector<1x128xf32>
    %20 = vector.broadcast %19 : vector<1x128xf32> to vector<16x128xf32>
    %21 = arith.addf %18, %20 : vector<16x128xf32>
    %cst_17 = arith.constant 0.000000e+00 : f32
    %22 = vector.broadcast %cst_17 : f32 to vector<16x128xf32>
    %23 = arith.maximumf %21, %22 : vector<16x128xf32>
    %24 = arith.truncf %23 : vector<16x128xf32> to vector<16x128xbf16>
    %c0_18 = arith.constant 0 : index
    %c0_19 = arith.constant 0 : index
    %25 = vector.load %arg8[%c0_18, %c0_19] : memref<128x128xbf16, #tpu.memory_space<vmem>>, vector<128x128xbf16>
    %cst_20 = arith.constant dense<0.000000e+00> : vector<16x128xf32>
    %26 = tpu.matmul %24, %25, %cst_20 {dimension_numbers = #tpu.dot_dimension_numbers<[1], [0], [0], [1], [0, 0, 1, 1], [], []>} : vector<16x128xbf16>, vector<128x128xbf16>, vector<16x128xf32> -> vector<16x128xf32>
    %c0_21 = arith.constant 0 : index
    %c0_22 = arith.constant 0 : index
    %27 = vector.load %arg9[%c0_21, %c0_22] : memref<1x128xf32, #tpu.memory_space<vmem>>, vector<1x128xf32>
    %28 = vector.broadcast %27 : vector<1x128xf32> to vector<16x128xf32>
    %29 = arith.addf %26, %28 : vector<16x128xf32>
    %30 = math.tanh %29 : vector<16x128xf32>
    %c0_23 = arith.constant 0 : index
    %c0_24 = arith.constant 0 : index
    %31 = vector.load %arg10[%c0_23, %c0_24] : memref<16x128xf32, #tpu.memory_space<vmem>>, vector<16x128xf32>
    tpu.vector_store %arg10[%c0_23, %c0_24], %30 {strides = array<i32>} : memref<16x128xf32, #tpu.memory_space<vmem>>, vector<16x128xf32>,
    return
  }
  func.func @transform_0(%arg0: i32) -> (i32, i32) {
    %c0_i32 = arith.constant 0 : i32
    %c0_i32_0 = arith.constant 0 : i32
    return %arg0, %c0_i32 : i32, i32
  }
  func.func @transform_1(%arg0: i32) -> (i32, i32) {
    %c0_i32 = arith.constant 0 : i32
    %c0_i32_0 = arith.constant 0 : i32
    %c0_i32_1 = arith.constant 0 : i32
    return %c0_i32, %c0_i32_0 : i32, i32
  }
  func.func @transform_2(%arg0: i32) -> (i32, i32) {
    %c0_i32 = arith.constant 0 : i32
    %c0_i32_0 = arith.constant 0 : i32
    %c0_i32_1 = arith.constant 0 : i32
    return %c0_i32, %c0_i32_0 : i32, i32
  }
  func.func @transform_3(%arg0: i32) -> (i32, i32) {
    %c0_i32 = arith.constant 0 : i32
    %c0_i32_0 = arith.constant 0 : i32
    %c0_i32_1 = arith.constant 0 : i32
    return %c0_i32, %c0_i32_0 : i32, i32
  }
  func.func @transform_4(%arg0: i32) -> (i32, i32) {
    %c0_i32 = arith.constant 0 : i32
    %c0_i32_0 = arith.constant 0 : i32
    %c0_i32_1 = arith.constant 0 : i32
    return %c0_i32, %c0_i32_0 : i32, i32
  }
  func.func @transform_5(%arg0: i32) -> (i32, i32) {
    %c0_i32 = arith.constant 0 : i32
    %c0_i32_0 = arith.constant 0 : i32
    %c0_i32_1 = arith.constant 0 : i32
    return %c0_i32, %c0_i32_0 : i32, i32
  }
  func.func @transform_6(%arg0: i32) -> (i32, i32) {
    %c0_i32 = arith.constant 0 : i32
    %c0_i32_0 = arith.constant 0 : i32
    %c0_i32_1 = arith.constant 0 : i32
    return %c0_i32, %c0_i32_0 : i32, i32
  }
  func.func @transform_7(%arg0: i32) -> (i32, i32) {
    %c0_i32 = arith.constant 0 : i32
    %c0_i32_0 = arith.constant 0 : i32
    %c0_i32_1 = arith.constant 0 : i32
    return %c0_i32, %c0_i32_0 : i32, i32
  }
  func.func @transform_8(%arg0: i32) -> (i32, i32) {
    %c0_i32 = arith.constant 0 : i32
    %c0_i32_0 = arith.constant 0 : i32
    %c0_i32_1 = arith.constant 0 : i32
    return %c0_i32, %c0_i32_0 : i32, i32
  }
  func.func @transform_9(%arg0: i32) -> (i32, i32) {
    %c0_i32 = arith.constant 0 : i32
    %c0_i32_0 = arith.constant 0 : i32
    return %arg0, %c0_i32 : i32, i32
  }
}

</mosaic_0001>

<llo_original>
// kernel: tpu_custom_call.1
$region0: #{tpu_custom_call.1}
  #allocation0 [shape = 'u32[]', space=smem, size = 0x4, offset = 0x4, fixed_abs, tag = 'smem constant byte address 0x4 - core index']
  #allocation1 [shape = 'u32[144,128]{1,0:T(1,128)}', space=vmem, size = 0x12000, scoped, tag = 'internal scratch']
  %s0 = inlined_call_operand.hbm [shape: bf16[16,128], index: 0, kind: input, shape index: {}]
  %s1 = inlined_call_operand.hbm [shape: bf16[128,256], index: 1, kind: input, shape index: {}]
  %s2 = inlined_call_operand.vmem [shape: f32[1,256], index: 2, kind: input, shape index: {}]
  %s3 = inlined_call_operand.hbm [shape: bf16[256,128], index: 3, kind: input, shape index: {}]
  %s4 = inlined_call_operand.vmem [shape: f32[1,128], index: 4, kind: input, shape index: {}]
  %s5 = inlined_call_operand.hbm [shape: bf16[128,128], index: 5, kind: input, shape index: {}]
  %s6 = inlined_call_operand.vmem [shape: f32[1,128], index: 6, kind: input, shape index: {}]
  %s7 = inlined_call_operand.hbm [shape: bf16[128,128], index: 7, kind: input, shape index: {}]
  %s8 = inlined_call_operand.vmem [shape: f32[1,128], index: 8, kind: input, shape index: {}]
  %s9 = inlined_call_operand.hbm [shape: f32[16,128], index: 9, kind: output, shape index: {}]
  %s10 = sld [smem:[#allocation0]]
  $region66: #{tpu_custom_call.1} parent=0
    _
  %s12 = ssub.s32 1, %s10
  %s13 = scalar_select 0, %s12, %s10
  $region1: #{tpu_custom_call.1} parent=0
    #allocation2 [shape = 'u8[4096]{0}', space=vmem, size = 0x1000, scoped, tag = 'input window, operand 0, single buffered']
    #allocation3 [shape = 's32[1]{0}', space=sflag, size = 0x4, scoped, tag = 'scoped memory for tpu_custom_call.1']
    #allocation4 [shape = 's32[1]{0}', space=sflag, size = 0x4, scoped, tag = 'scoped memory for tpu_custom_call.1']
    #allocation5 [shape = 'u8[65536]{0}', space=vmem, size = 0x10000, scoped, tag = 'input window, operand 1, single buffered']
    #allocation6 [shape = 's32[1]{0}', space=sflag, size = 0x4, scoped, tag = 'scoped memory for tpu_custom_call.1']
    #allocation7 [shape = 'u8[65536]{0}', space=vmem, size = 0x10000, scoped, tag = 'input window, operand 3, single buffered']
    #allocation8 [shape = 'u8[32768]{0}', space=vmem, size = 0x8000, scoped, tag = 'input window, operand 5, single buffered']
    #allocation9 [shape = 's32[1]{0}', space=sflag, size = 0x4, scoped, tag = 'scoped memory for tpu_custom_call.1']
    #allocation10 [shape = 'u8[32768]{0}', space=vmem, size = 0x8000, scoped, tag = 'input window, operand 7, single buffered']
    #allocation11 [shape = 'u8[8192]{0}', space=vmem, size = 0x2000, scoped, tag = 'output window, operand 0, single buffered']
    %14 = vsyncpa [#allocation3], 0
    %15 = vsyncpa [#allocation6], 0
    %16 = vsyncpa [#allocation9], 0
    %17 = vsyncpa [#allocation4], 0
    // Predicated region
    $region2: #{tpu_custom_call.1} parent=1 // pred_check
      _
    $region3: #{tpu_custom_call.1} parent=1 // pred_check_branch
      %19 = sbr.rel (0) target = $region5
    $region4: #{tpu_custom_call.1} parent=1 // pred_region
      %s21 = ssub.s32 128, 128
      %22 = vsyncadd [#allocation3], %s21
      %s23 = sshll.u32 [#allocation2], 4
      %s24 = int_to_ptr.vmem [resolvable:$true] %s23
      %29 = dma.hbm_to_vmem [thread:$0]  %s0, 128, %s24, [#allocation3], 64, 64, 4
    $region5: #{tpu_custom_call.1} parent=1 // pred_fallthru
      _
    // Predicated region
    $region6: #{tpu_custom_call.1} parent=1 // pred_check
      _
    $region7: #{tpu_custom_call.1} parent=1 // pred_check_branch
      %31 = sbr.rel (0) target = $region9
    $region8: #{tpu_custom_call.1} parent=1 // pred_region
      %s33 = ssub.s32 2048, 2048
      %34 = vsyncadd [#allocation6], %s33
      %s35 = sshll.u32 [#allocation5], 4
      %s36 = int_to_ptr.vmem [resolvable:$true] %s35
      %41 = dma.hbm_to_vmem [thread:$0]  %s1, 2048, %s36, [#allocation6], 128, 128, 8
    $region9: #{tpu_custom_call.1} parent=1 // pred_fallthru
      _
    // Predicated region
    $region10: #{tpu_custom_call.1} parent=1 // pred_check
      _
    $region11: #{tpu_custom_call.1} parent=1 // pred_check_branch
      %43 = sbr.rel (0) target = $region13
    $region12: #{tpu_custom_call.1} parent=1 // pred_region
      _
    $region13: #{tpu_custom_call.1} parent=1 // pred_fallthru
      _
    // Predicated region
    $region14: #{tpu_custom_call.1} parent=1 // pred_check
      _
    $region15: #{tpu_custom_call.1} parent=1 // pred_check_branch
      %45 = sbr.rel (0) target = $region17
    $region16: #{tpu_custom_call.1} parent=1 // pred_region
      %s47 = ssub.s32 2048, 2048
      %48 = vsyncadd [#allocation6], %s47
      %s49 = sshll.u32 [#allocation7], 4
      %s50 = int_to_ptr.vmem [resolvable:$true] %s49
      %55 = dma.hbm_to_vmem [thread:$0]  %s3, 2048, %s50, [#allocation6], 64, 64, 4
    $region17: #{tpu_custom_call.1} parent=1 // pred_fallthru
      _
    // Predicated region
    $region18: #{tpu_custom_call.1} parent=1 // pred_check
      _
    $region19: #{tpu_custom_call.1} parent=1 // pred_check_branch
      %57 = sbr.rel (0) target = $region21
    $region20: #{tpu_custom_call.1} parent=1 // pred_region
      _
    $region21: #{tpu_custom_call.1} parent=1 // pred_fallthru
      _
    // Predicated region
    $region22: #{tpu_custom_call.1} parent=1 // pred_check
      _
    $region23: #{tpu_custom_call.1} parent=1 // pred_check_branch
      %59 = sbr.rel (0) target = $region25
    $region24: #{tpu_custom_call.1} parent=1 // pred_region
      %s61 = ssub.s32 1024, 1024
      %62 = vsyncadd [#allocation9], %s61
      %s63 = sshll.u32 [#allocation8], 4
      %s64 = int_to_ptr.vmem [resolvable:$true] %s63
      %69 = dma.hbm_to_vmem [thread:$0]  %s5, 1024, %s64, [#allocation9], 64, 64, 4
    $region25: #{tpu_custom_call.1} parent=1 // pred_fallthru
      _
    // Predicated region
    $region26: #{tpu_custom_call.1} parent=1 // pred_check
      _
    $region27: #{tpu_custom_call.1} parent=1 // pred_check_branch
      %71 = sbr.rel (0) target = $region29
    $region28: #{tpu_custom_call.1} parent=1 // pred_region
      _
    $region29: #{tpu_custom_call.1} parent=1 // pred_fallthru
      _
    // Predicated region
    $region30: #{tpu_custom_call.1} parent=1 // pred_check
      _
    $region31: #{tpu_custom_call.1} parent=1 // pred_check_branch
      %73 = sbr.rel (0) target = $region33
    $region32: #{tpu_custom_call.1} parent=1 // pred_region
      %s75 = ssub.s32 1024, 1024
      %76 = vsyncadd [#allocation9], %s75
      %s77 = sshll.u32 [#allocation10], 4
      %s78 = int_to_ptr.vmem [resolvable:$true] %s77
      %83 = dma.hbm_to_vmem [thread:$0]  %s7, 1024, %s78, [#allocation9], 64, 64, 4
    $region33: #{tpu_custom_call.1} parent=1 // pred_fallthru
      _
    // Predicated region
    $region34: #{tpu_custom_call.1} parent=1 // pred_check
      _
    $region35: #{tpu_custom_call.1} parent=1 // pred_check_branch
      %85 = sbr.rel (0) target = $region37
    $region36: #{tpu_custom_call.1} parent=1 // pred_region
      _
    $region37: #{tpu_custom_call.1} parent=1 // pred_fallthru
      _
    // Predicated region
    $region38: #{tpu_custom_call.1} parent=1 // pred_check
      _
    $region39: #{tpu_custom_call.1} parent=1 // pred_check_branch
      %87 = sbr.rel (0) target = $region41
    $region40: #{tpu_custom_call.1} parent=1 // pred_region
      %88 = dma.done [#allocation3], 128
    $region41: #{tpu_custom_call.1} parent=1 // pred_fallthru
      _
    // Predicated region
    $region42: #{tpu_custom_call.1} parent=1 // pred_check
      _
    $region43: #{tpu_custom_call.1} parent=1 // pred_check_branch
      %90 = sbr.rel (0) target = $region45
    $region44: #{tpu_custom_call.1} parent=1 // pred_region
      %91 = dma.done [#allocation6], 2048
    $region45: #{tpu_custom_call.1} parent=1 // pred_fallthru
      _
    // Predicated region
    $region46: #{tpu_custom_call.1} parent=1 // pred_check
      _
    $region47: #{tpu_custom_call.1} parent=1 // pred_check_branch
      %93 = sbr.rel (0) target = $region49
    $region48: #{tpu_custom_call.1} parent=1 // pred_region
      %94 = dma.done [#allocation6], 2048
    $region49: #{tpu_custom_call.1} parent=1 // pred_fallthru
      _
    // Predicated region
    $region50: #{tpu_custom_call.1} parent=1 // pred_check
      _
    $region51: #{tpu_custom_call.1} parent=1 // pred_check_branch
      %96 = sbr.rel (0) target = $region53
    $region52: #{tpu_custom_call.1} parent=1 // pred_region
      %97 = dma.done [#allocation9], 1024
    $region53: #{tpu_custom_call.1} parent=1 // pred_fallthru
      _
    // Predicated region
    $region54: #{tpu_custom_call.1} parent=1 // pred_check
      _
    $region55: #{tpu_custom_call.1} parent=1 // pred_check_branch
      %99 = sbr.rel (0) target = $region57
    $region56: #{tpu_custom_call.1} parent=1 // pred_region
      %100 = dma.done [#allocation9], 1024
    $region57: #{tpu_custom_call.1} parent=1 // pred_fallthru
      _
    %v102 = vld [vmem:[#allocation2] sm:$0xf]
    %v103 = vld [vmem:[#allocation2 + $0x4] sm:$0xf]
    %v104 = vld [vmem:[#allocation5] sm:$0xff]
    %v105 = vld [vmem:[#allocation5 + $0x8] sm:$0xff]
    %v106 = vld [vmem:[#allocation5 + $0x10] sm:$0xff]
    %v107 = vld [vmem:[#allocation5 + $0x18] sm:$0xff]
    %v108 = vld [vmem:[#allocation5 + $0x20] sm:$0xff]
    %v109 = vld [vmem:[#allocation5 + $0x28] sm:$0xff]
    %v110 = vld [vmem:[#allocation5 + $0x30] sm:$0xff]
    %v111 = vld [vmem:[#allocation5 + $0x38] sm:$0xff]
    %v112 = vld [vmem:[#allocation5 + $0x40] sm:$0xff]
    %v113 = vld [vmem:[#allocation5 + $0x48] sm:$0xff]
    %v114 = vld [vmem:[#allocation5 + $0x50] sm:$0xff]
    %v115 = vld [vmem:[#allocation5 + $0x58] sm:$0xff]
    %v116 = vld [vmem:[#allocation5 + $0x60] sm:$0xff]
    %v117 = vld [vmem:[#allocation5 + $0x68] sm:$0xff]
    %v118 = vld [vmem:[#allocation5 + $0x70] sm:$0xff]
    %v119 = vld [vmem:[#allocation5 + $0x78] sm:$0xff]
    %v120 = vld [vmem:[%s2] sm:$0x3]
    %v122 = vlaneseq
    %v123 = vshrl.u32 %v122, 7
    %v124 = vsub.s32 0, %v123
    %v125 = vrot.slane %v120, %v124
    %v126 = vlaneseq
    %v127 = vshrl.u32 %v126, 7
    %v128 = vsub.s32 1, %v127
    %v129 = vrot.slane %v120, %v128
    %v134 = vunpack.c.l.b16 %v102
    %v135 = vunpack.c.l.b16 %v103
    %v136 = vpack.c.b16 %v135, %v134
    %v154 = vunpack.c.l.b16 %v104
    %v155 = vunpack.c.h.b16 %v104
    %v156 = vunpack.c.l.b16 %v105
    %v157 = vunpack.c.h.b16 %v105
    %v158 = vunpack.c.l.b16 %v106
    %v159 = vunpack.c.h.b16 %v106
    %v160 = vunpack.c.l.b16 %v107
    %v161 = vunpack.c.h.b16 %v107
    %v162 = vunpack.c.l.b16 %v108
    %v163 = vunpack.c.h.b16 %v108
    %v164 = vunpack.c.l.b16 %v109
    %v165 = vunpack.c.h.b16 %v109
    %v166 = vunpack.c.l.b16 %v110
    %v167 = vunpack.c.h.b16 %v110
    %v168 = vunpack.c.l.b16 %v111
    %v169 = vunpack.c.h.b16 %v111
    %v170 = vunpack.c.l.b16 %v112
    %v171 = vunpack.c.h.b16 %v112
    %v172 = vunpack.c.l.b16 %v113
    %v173 = vunpack.c.h.b16 %v113
    %v174 = vunpack.c.l.b16 %v114
    %v175 = vunpack.c.h.b16 %v114
    %v176 = vunpack.c.l.b16 %v115
    %v177 = vunpack.c.h.b16 %v115
    %v178 = vunpack.c.l.b16 %v116
    %v179 = vunpack.c.h.b16 %v116
    %v180 = vunpack.c.l.b16 %v117
    %v181 = vunpack.c.h.b16 %v117
    %v182 = vunpack.c.l.b16 %v118
    %v183 = vunpack.c.h.b16 %v118
    %v184 = vunpack.c.l.b16 %v119
    %v185 = vunpack.c.h.b16 %v119
    %v186 = vpack.c.b16 %v156, %v154
    %v187 = vpack.c.b16 %v157, %v155
    %v188 = vpack.c.b16 %v160, %v158
    %v189 = vpack.c.b16 %v161, %v159
    %v190 = vpack.c.b16 %v164, %v162
    %v191 = vpack.c.b16 %v165, %v163
    %v192 = vpack.c.b16 %v168, %v166
    %v193 = vpack.c.b16 %v169, %v167
    %v194 = vpack.c.b16 %v172, %v170
    %v195 = vpack.c.b16 %v173, %v171
    %v196 = vpack.c.b16 %v176, %v174
    %v197 = vpack.c.b16 %v177, %v175
    %v198 = vpack.c.b16 %v180, %v178
    %v199 = vpack.c.b16 %v181, %v179
    %v200 = vpack.c.b16 %v184, %v182
    %v201 = vpack.c.b16 %v185, %v183
    %218 = vmatprep.subr.bf16.mxu0 %v187
    %219 = vmatpush1.bf16.msra.mxu0 %v186
    %220 = vmatprep.subr.bf16.mxu0 %v189
    %221 = vmatpush1.bf16.msra.mxu0 %v188
    %222 = vmatprep.subr.bf16.mxu0 %v191
    %223 = vmatpush1.bf16.msra.mxu0 %v190
    %224 = vmatprep.subr.bf16.mxu0 %v193
    %225 = vmatpush1.bf16.msra.mxu0 %v192
    %226 = vmatprep.subr.bf16.mxu0 %v195
    %227 = vmatpush1.bf16.msra.mxu0 %v194
    %228 = vmatprep.subr.bf16.mxu0 %v197
    %229 = vmatpush1.bf16.msra.mxu0 %v196
    %230 = vmatprep.subr.bf16.mxu0 %v199
    %231 = vmatpush1.bf16.msra.mxu0 %v198
    %232 = vmatprep.subr.bf16.mxu0 %v201
    %233 = vmatpush1.bf16.msra.mxu0 %v200
    %234 = vmatprep.subr.bf16.mxu0 0
    %235 = vmatpush1.bf16.msra.mxu0 0
    %236 = vmatprep.subr.bf16.mxu0 0
    %237 = vmatpush1.bf16.msra.mxu0 0
    %238 = vmatprep.subr.bf16.mxu0 0
    %239 = vmatpush1.bf16.msra.mxu0 0
    %240 = vmatprep.subr.bf16.mxu0 0
    %241 = vmatpush1.bf16.msra.mxu0 0
    %242 = vmatprep.subr.bf16.mxu0 0
    %243 = vmatpush1.bf16.msra.mxu0 0
    %244 = vmatprep.subr.bf16.mxu0 0
    %245 = vmatpush1.bf16.msra.mxu0 0
    %246 = vmatprep.subr.bf16.mxu0 0
    %247 = vmatpush1.bf16.msra.mxu0 0
    %248 = vmatprep.subr.bf16.mxu0 0
    %249 = vmatpush1.bf16.msra.mxu0 0
    %250 = vmatprep.mubr.bf16.mxu0 0
    %251 = vmatmul.mubr.bf16.gmra.mrb[0].mxu0 %v136
    %v252 = vpop.f32.mrb[0].mxu0
    %v253 = vadd.f32 %v125, %v252
    %v254 = vpop.f32.mrb[0].mxu0
    %v255 = vadd.f32 %v129, %v254
    %v256 = vpop.f32.mrb[0].mxu0
    %v257 = vadd.f32 %v125, %v256
    %v258 = vpop.f32.mrb[0].mxu0
    %v259 = vadd.f32 %v129, %v258
    %260 = vdwg.mxu0
    %v261 = vmax.f32 %v253, 0.0
    %v262 = vmax.f32 %v255, 0.0
    %v263 = vmax.f32 %v257, 0.0
    %v264 = vmax.f32 %v259, 0.0
    %v265 = vpack.c.bf16 %v263, %v261
    %v266 = vpack.c.bf16 %v264, %v262
    %v267 = vld [vmem:[#allocation7] sm:$0xf]
    %v268 = vld [vmem:[#allocation7 + $0x4] sm:$0xf]
    %v269 = vld [vmem:[#allocation7 + $0x8] sm:$0xf]
    %v270 = vld [vmem:[#allocation7 + $0xc] sm:$0xf]
    %v271 = vld [vmem:[#allocation7 + $0x10] sm:$0xf]
    %v272 = vld [vmem:[#allocation7 + $0x14] sm:$0xf]
    %v273 = vld [vmem:[#allocation7 + $0x18] sm:$0xf]
    %v274 = vld [vmem:[#allocation7 + $0x1c] sm:$0xf]
    %v275 = vld [vmem:[#allocation7 + $0x20] sm:$0xf]
    %v276 = vld [vmem:[#allocation7 + $0x24] sm:$0xf]
    %v277 = vld [vmem:[#allocation7 + $0x28] sm:$0xf]
    %v278 = vld [vmem:[#allocation7 + $0x2c] sm:$0xf]
    %v279 = vld [vmem:[#allocation7 + $0x30] sm:$0xf]
    %v280 = vld [vmem:[#allocation7 + $0x34] sm:$0xf]
    %v281 = vld [vmem:[#allocation7 + $0x38] sm:$0xf]
    %v282 = vld [vmem:[#allocation7 + $0x3c] sm:$0xf]
    %v283 = vld [vmem:[#allocation7 + $0x40] sm:$0xf]
    %v284 = vld [vmem:[#allocation7 + $0x44] sm:$0xf]
    %v285 = vld [vmem:[#allocation7 + $0x48] sm:$0xf]
    %v286 = vld [vmem:[#allocation7 + $0x4c] sm:$0xf]
    %v287 = vld [vmem:[#allocation7 + $0x50] sm:$0xf]
    %v288 = vld [vmem:[#allocation7 + $0x54] sm:$0xf]
    %v289 = vld [vmem:[#allocation7 + $0x58] sm:$0xf]
    %v290 = vld [vmem:[#allocation7 + $0x5c] sm:$0xf]
    %v291 = vld [vmem:[#allocation7 + $0x60] sm:$0xf]
    %v292 = vld [vmem:[#allocation7 + $0x64] sm:$0xf]
    %v293 = vld [vmem:[#allocation7 + $0x68] sm:$0xf]
    %v294 = vld [vmem:[#allocation7 + $0x6c] sm:$0xf]
    %v295 = vld [vmem:[#allocation7 + $0x70] sm:$0xf]
    %v296 = vld [vmem:[#allocation7 + $0x74] sm:$0xf]
    %v297 = vld [vmem:[#allocation7 + $0x78] sm:$0xf]
    %v298 = vld [vmem:[#allocation7 + $0x7c] sm:$0xf]
    %v299 = vld [vmem:[%s4] sm:$0x1]
    %v301 = vlaneseq
    %v302 = vshrl.u32 %v301, 7
    %v303 = vsub.s32 0, %v302
    %v304 = vrot.slane %v299, %v303
    %v338 = vunpack.c.l.b16 %v267
    %v339 = vunpack.c.l.b16 %v268
    %v340 = vunpack.c.l.b16 %v269
    %v341 = vunpack.c.l.b16 %v270
    %v342 = vunpack.c.l.b16 %v271
    %v343 = vunpack.c.l.b16 %v272
    %v344 = vunpack.c.l.b16 %v273
    %v345 = vunpack.c.l.b16 %v274
    %v346 = vunpack.c.l.b16 %v275
    %v347 = vunpack.c.l.b16 %v276
    %v348 = vunpack.c.l.b16 %v277
    %v349 = vunpack.c.l.b16 %v278
    %v350 = vunpack.c.l.b16 %v279
    %v351 = vunpack.c.l.b16 %v280
    %v352 = vunpack.c.l.b16 %v281
    %v353 = vunpack.c.l.b16 %v282
    %v354 = vunpack.c.l.b16 %v283
    %v355 = vunpack.c.l.b16 %v284
    %v356 = vunpack.c.l.b16 %v285
    %v357 = vunpack.c.l.b16 %v286
    %v358 = vunpack.c.l.b16 %v287
    %v359 = vunpack.c.l.b16 %v288
    %v360 = vunpack.c.l.b16 %v289
    %v361 = vunpack.c.l.b16 %v290
    %v362 = vunpack.c.l.b16 %v291
    %v363 = vunpack.c.l.b16 %v292
    %v364 = vunpack.c.l.b16 %v293
    %v365 = vunpack.c.l.b16 %v294
    %v366 = vunpack.c.l.b16 %v295
    %v367 = vunpack.c.l.b16 %v296
    %v368 = vunpack.c.l.b16 %v297
    %v369 = vunpack.c.l.b16 %v298
    %v370 = vpack.c.b16 %v339, %v338
    %v371 = vpack.c.b16 %v341, %v340
    %v372 = vpack.c.b16 %v343, %v342
    %v373 = vpack.c.b16 %v345, %v344
    %v374 = vpack.c.b16 %v347, %v346
    %v375 = vpack.c.b16 %v349, %v348
    %v376 = vpack.c.b16 %v351, %v350
    %v377 = vpack.c.b16 %v353, %v352
    %v378 = vpack.c.b16 %v355, %v354
    %v379 = vpack.c.b16 %v357, %v356
    %v380 = vpack.c.b16 %v359, %v358
    %v381 = vpack.c.b16 %v361, %v360
    %v382 = vpack.c.b16 %v363, %v362
    %v383 = vpack.c.b16 %v365, %v364
    %v384 = vpack.c.b16 %v367, %v366
    %v385 = vpack.c.b16 %v369, %v368
    %402 = vmatprep.subr.bf16.mxu0 0
    %403 = vmatpush1.bf16.msra.mxu0 %v370
    %404 = vmatprep.subr.bf16.mxu0 0
    %405 = vmatpush1.bf16.msra.mxu0 %v371
    %406 = vmatprep.subr.bf16.mxu0 0
    %407 = vmatpush1.bf16.msra.mxu0 %v372
    %408 = vmatprep.subr.bf16.mxu0 0
    %409 = vmatpush1.bf16.msra.mxu0 %v373
    %410 = vmatprep.subr.bf16.mxu0 0
    %411 = vmatpush1.bf16.msra.mxu0 %v374
    %412 = vmatprep.subr.bf16.mxu0 0
    %413 = vmatpush1.bf16.msra.mxu0 %v375
    %414 = vmatprep.subr.bf16.mxu0 0
    %415 = vmatpush1.bf16.msra.mxu0 %v376
    %416 = vmatprep.subr.bf16.mxu0 0
    %417 = vmatpush1.bf16.msra.mxu0 %v377
    %418 = vmatprep.subr.bf16.mxu0 0
    %419 = vmatpush1.bf16.msra.mxu0 %v378
    %420 = vmatprep.subr.bf16.mxu0 0
    %421 = vmatpush1.bf16.msra.mxu0 %v379
    %422 = vmatprep.subr.bf16.mxu0 0
    %423 = vmatpush1.bf16.msra.mxu0 %v380
    %424 = vmatprep.subr.bf16.mxu0 0
    %425 = vmatpush1.bf16.msra.mxu0 %v381
    %426 = vmatprep.subr.bf16.mxu0 0
    %427 = vmatpush1.bf16.msra.mxu0 %v382
    %428 = vmatprep.subr.bf16.mxu0 0
    %429 = vmatpush1.bf16.msra.mxu0 %v383
    %430 = vmatprep.subr.bf16.mxu0 0
    %431 = vmatpush1.bf16.msra.mxu0 %v384
    %432 = vmatprep.subr.bf16.mxu0 0
    %433 = vmatpush1.bf16.msra.mxu0 %v385
    %434 = vmatprep.mubr.bf16.mxu0 %v266
    %435 = vmatmul.mubr.bf16.gmra.mrb[0].mxu0 %v265
    %v436 = vpop.f32.mrb[0].mxu0
    %v437 = vadd.f32 %v304, %v436
    %v438 = vpop.f32.mrb[0].mxu0
    %v439 = vpop.f32.mrb[0].mxu0
    %v440 = vadd.f32 %v304, %v439
    %v441 = vpop.f32.mrb[0].mxu0
    %442 = vdwg.mxu0
    %v443 = vmax.f32 %v437, 0.0
    %v444 = vmax.f32 %v440, 0.0
    %v445 = vpack.c.bf16 %v444, %v443
    %v446 = vld [vmem:[#allocation8] sm:$0xf]
    %v447 = vld [vmem:[#allocation8 + $0x4] sm:$0xf]
    %v448 = vld [vmem:[#allocation8 + $0x8] sm:$0xf]
    %v449 = vld [vmem:[#allocation8 + $0xc] sm:$0xf]
    %v450 = vld [vmem:[#allocation8 + $0x10] sm:$0xf]
    %v451 = vld [vmem:[#allocation8 + $0x14] sm:$0xf]
    %v452 = vld [vmem:[#allocation8 + $0x18] sm:$0xf]
    %v453 = vld [vmem:[#allocation8 + $0x1c] sm:$0xf]
    %v454 = vld [vmem:[#allocation8 + $0x20] sm:$0xf]
    %v455 = vld [vmem:[#allocation8 + $0x24] sm:$0xf]
    %v456 = vld [vmem:[#allocation8 + $0x28] sm:$0xf]
    %v457 = vld [vmem:[#allocation8 + $0x2c] sm:$0xf]
    %v458 = vld [vmem:[#allocation8 + $0x30] sm:$0xf]
    %v459 = vld [vmem:[#allocation8 + $0x34] sm:$0xf]
    %v460 = vld [vmem:[#allocation8 + $0x38] sm:$0xf]
    %v461 = vld [vmem:[#allocation8 + $0x3c] sm:$0xf]
    %v462 = vld [vmem:[%s6] sm:$0x1]
    %v464 = vlaneseq
    %v465 = vshrl.u32 %v464, 7
    %v466 = vsub.s32 0, %v465
    %v467 = vrot.slane %v462, %v466
    %v485 = vunpack.c.l.b16 %v446
    %v486 = vunpack.c.l.b16 %v447
    %v487 = vunpack.c.l.b16 %v448
    %v488 = vunpack.c.l.b16 %v449
    %v489 = vunpack.c.l.b16 %v450
    %v490 = vunpack.c.l.b16 %v451
    %v491 = vunpack.c.l.b16 %v452
    %v492 = vunpack.c.l.b16 %v453
    %v493 = vunpack.c.l.b16 %v454
    %v494 = vunpack.c.l.b16 %v455
    %v495 = vunpack.c.l.b16 %v456
    %v496 = vunpack.c.l.b16 %v457
    %v497 = vunpack.c.l.b16 %v458
    %v498 = vunpack.c.l.b16 %v459
    %v499 = vunpack.c.l.b16 %v460
    %v500 = vunpack.c.l.b16 %v461
    %v501 = vpack.c.b16 %v486, %v485
    %v502 = vpack.c.b16 %v488, %v487
    %v503 = vpack.c.b16 %v490, %v489
    %v504 = vpack.c.b16 %v492, %v491
    %v505 = vpack.c.b16 %v494, %v493
    %v506 = vpack.c.b16 %v496, %v495
    %v507 = vpack.c.b16 %v498, %v497
    %v508 = vpack.c.b16 %v500, %v499
    %517 = vmatprep.subr.bf16.mxu0 0
    %518 = vmatpush1.bf16.msra.mxu0 %v501
    %519 = vmatprep.subr.bf16.mxu0 0
    %520 = vmatpush1.bf16.msra.mxu0 %v502
    %521 = vmatprep.subr.bf16.mxu0 0
    %522 = vmatpush1.bf16.msra.mxu0 %v503
    %523 = vmatprep.subr.bf16.mxu0 0
    %524 = vmatpush1.bf16.msra.mxu0 %v504
    %525 = vmatprep.subr.bf16.mxu0 0
    %526 = vmatpush1.bf16.msra.mxu0 %v505
    %527 = vmatprep.subr.bf16.mxu0 0
    %528 = vmatpush1.bf16.msra.mxu0 %v506
    %529 = vmatprep.subr.bf16.mxu0 0
    %530 = vmatpush1.bf16.msra.mxu0 %v507
    %531 = vmatprep.subr.bf16.mxu0 0
    %532 = vmatpush1.bf16.msra.mxu0 %v508
    %533 = vmatprep.subr.bf16.mxu0 0
    %534 = vmatpush1.bf16.msra.mxu0 0
    %535 = vmatprep.subr.bf16.mxu0 0
    %536 = vmatpush1.bf16.msra.mxu0 0
    %537 = vmatprep.subr.bf16.mxu0 0
    %538 = vmatpush1.bf16.msra.mxu0 0
    %539 = vmatprep.subr.bf16.mxu0 0
    %540 = vmatpush1.bf16.msra.mxu0 0
    %541 = vmatprep.subr.bf16.mxu0 0
    %542 = vmatpush1.bf16.msra.mxu0 0
    %543 = vmatprep.subr.bf16.mxu0 0
    %544 = vmatpush1.bf16.msra.mxu0 0
    %545 = vmatprep.subr.bf16.mxu0 0
    %546 = vmatpush1.bf16.msra.mxu0 0
    %547 = vmatprep.subr.bf16.mxu0 0
    %548 = vmatpush1.bf16.msra.mxu0 0
    %549 = vmatprep.mubr.bf16.mxu0 0
    %550 = vmatmul.mubr.bf16.gmra.mrb[0].mxu0 %v445
    %v551 = vpop.f32.mrb[0].mxu0
    %v552 = vadd.f32 %v467, %v551
    %v553 = vpop.f32.mrb[0].mxu0
    %v554 = vpop.f32.mrb[0].mxu0
    %v555 = vadd.f32 %v467, %v554
    %v556 = vpop.f32.mrb[0].mxu0
    %557 = vdwg.mxu0
    %v558 = vmax.f32 %v552, 0.0
    %v559 = vmax.f32 %v555, 0.0
    %v560 = vpack.c.bf16 %v559, %v558
    %v561 = vld [vmem:[#allocation10] sm:$0xf]
    %v562 = vld [vmem:[#allocation10 + $0x4] sm:$0xf]
    %v563 = vld [vmem:[#allocation10 + $0x8] sm:$0xf]
    %v564 = vld [vmem:[#allocation10 + $0xc] sm:$0xf]
    %v565 = vld [vmem:[#allocation10 + $0x10] sm:$0xf]
    %v566 = vld [vmem:[#allocation10 + $0x14] sm:$0xf]
    %v567 = vld [vmem:[#allocation10 + $0x18] sm:$0xf]
    %v568 = vld [vmem:[#allocation10 + $0x1c] sm:$0xf]
    %v569 = vld [vmem:[#allocation10 + $0x20] sm:$0xf]
    %v570 = vld [vmem:[#allocation10 + $0x24] sm:$0xf]
    %v571 = vld [vmem:[#allocation10 + $0x28] sm:$0xf]
    %v572 = vld [vmem:[#allocation10 + $0x2c] sm:$0xf]
    %v573 = vld [vmem:[#allocation10 + $0x30] sm:$0xf]
    %v574 = vld [vmem:[#allocation10 + $0x34] sm:$0xf]
    %v575 = vld [vmem:[#allocation10 + $0x38] sm:$0xf]
    %v576 = vld [vmem:[#allocation10 + $0x3c] sm:$0xf]
    %v577 = vld [vmem:[%s8] sm:$0x1]
    %v579 = vlaneseq
    %v580 = vshrl.u32 %v579, 7
    %v581 = vsub.s32 0, %v580
    %v582 = vrot.slane %v577, %v581
    %v600 = vunpack.c.l.b16 %v561
    %v601 = vunpack.c.l.b16 %v562
    %v602 = vunpack.c.l.b16 %v563
    %v603 = vunpack.c.l.b16 %v564
    %v604 = vunpack.c.l.b16 %v565
    %v605 = vunpack.c.l.b16 %v566
    %v606 = vunpack.c.l.b16 %v567
    %v607 = vunpack.c.l.b16 %v568
    %v608 = vunpack.c.l.b16 %v569
    %v609 = vunpack.c.l.b16 %v570
    %v610 = vunpack.c.l.b16 %v571
    %v611 = vunpack.c.l.b16 %v572
    %v612 = vunpack.c.l.b16 %v573
    %v613 = vunpack.c.l.b16 %v574
    %v614 = vunpack.c.l.b16 %v575
    %v615 = vunpack.c.l.b16 %v576
    %v616 = vpack.c.b16 %v601, %v600
    %v617 = vpack.c.b16 %v603, %v602
    %v618 = vpack.c.b16 %v605, %v604
    %v619 = vpack.c.b16 %v607, %v606
    %v620 = vpack.c.b16 %v609, %v608
    %v621 = vpack.c.b16 %v611, %v610
    %v622 = vpack.c.b16 %v613, %v612
    %v623 = vpack.c.b16 %v615, %v614
    %632 = vmatprep.subr.bf16.mxu0 0
    %633 = vmatpush1.bf16.msra.mxu0 %v616
    %634 = vmatprep.subr.bf16.mxu0 0
    %635 = vmatpush1.bf16.msra.mxu0 %v617
    %636 = vmatprep.subr.bf16.mxu0 0
    %637 = vmatpush1.bf16.msra.mxu0 %v618
    %638 = vmatprep.subr.bf16.mxu0 0
    %639 = vmatpush1.bf16.msra.mxu0 %v619
    %640 = vmatprep.subr.bf16.mxu0 0
    %641 = vmatpush1.bf16.msra.mxu0 %v620
    %642 = vmatprep.subr.bf16.mxu0 0
    %643 = vmatpush1.bf16.msra.mxu0 %v621
    %644 = vmatprep.subr.bf16.mxu0 0
    %645 = vmatpush1.bf16.msra.mxu0 %v622
    %646 = vmatprep.subr.bf16.mxu0 0
    %647 = vmatpush1.bf16.msra.mxu0 %v623
    %648 = vmatprep.subr.bf16.mxu0 0
    %649 = vmatpush1.bf16.msra.mxu0 0
    %650 = vmatprep.subr.bf16.mxu0 0
    %651 = vmatpush1.bf16.msra.mxu0 0
    %652 = vmatprep.subr.bf16.mxu0 0
    %653 = vmatpush1.bf16.msra.mxu0 0
    %654 = vmatprep.subr.bf16.mxu0 0
    %655 = vmatpush1.bf16.msra.mxu0 0
    %656 = vmatprep.subr.bf16.mxu0 0
    %657 = vmatpush1.bf16.msra.mxu0 0
    %658 = vmatprep.subr.bf16.mxu0 0
    %659 = vmatpush1.bf16.msra.mxu0 0
    %660 = vmatprep.subr.bf16.mxu0 0
    %661 = vmatpush1.bf16.msra.mxu0 0
    %662 = vmatprep.subr.bf16.mxu0 0
    %663 = vmatpush1.bf16.msra.mxu0 0
    %664 = vmatprep.mubr.bf16.mxu0 0
    %665 = vmatmul.mubr.bf16.gmra.mrb[0].mxu0 %v560
    %v666 = vpop.f32.mrb[0].mxu0
    %v667 = vadd.f32 %v582, %v666
    %v668 = vpop.f32.mrb[0].mxu0
    %v669 = vpop.f32.mrb[0].mxu0
    %v670 = vadd.f32 %v582, %v669
    %v671 = vpop.f32.mrb[0].mxu0
    %672 = vdwg.mxu0
    %v673 = vtanh.pop %v667
    %v674 = vtanh.pop %v670
    %675 = vst [vmem:[#allocation11] sm:$0xff] %v673
    %676 = vst [vmem:[#allocation11 + $0x8] sm:$0xff] %v674
    // Predicated region
    $region58: #{tpu_custom_call.1} parent=1 // pred_check
      _
    $region59: #{tpu_custom_call.1} parent=1 // pred_check_branch
      %678 = sbr.rel (0) target = $region61
    $region60: #{tpu_custom_call.1} parent=1 // pred_region
      %s680 = ssub.s32 256, 256
      %681 = vsyncadd [#allocation4], %s680
      %s682 = sshll.u32 [#allocation11], 4
      %s683 = int_to_ptr.vmem [resolvable:$true] %s682
      %688 = dma.vmem_to_hbm [thread:$0]  %s683, 256, %s9, [#allocation4], 128, 128, 8
    $region61: #{tpu_custom_call.1} parent=1 // pred_fallthru
      _
    // Predicated region
    $region62: #{tpu_custom_call.1} parent=1 // pred_check
      _
    $region63: #{tpu_custom_call.1} parent=1 // pred_check_branch
      %690 = sbr.rel (0) target = $region65
    $region64: #{tpu_custom_call.1} parent=1 // pred_region
      %691 = dma.done [#allocation4], 256
    $region65: #{tpu_custom_call.1} parent=1 // pred_fallthru
      _
    %692 = vsyncpa [#allocation3], 1
    %693 = vsyncpa [#allocation6], 1
    %694 = vsyncpa [#allocation9], 1
    %695 = vsyncpa [#allocation4], 1

</llo_original>
